<compile_context>
chip_gen: v5e
topology: v5e:2x2
jax: 0.10.0
libtpu: 0.0.40
codegen_flags: <defaults>
</compile_context>

<pallas_src>
import math
import jax
import jax.numpy as jnp
from jax.experimental import pallas as pl
from jax.experimental.pallas import tpu as pltpu


def _pe_add_kernel(x_ref, pe_ref, o_ref):
    # x_ref: (tS, B, D), pe_ref: (tS, 1, D) -> broadcasts over the batch axis.
    o_ref[...] = x_ref[...] + pe_ref[...]


def make_positional_encoding_table(d_model: int, max_len: int = 5000) -> jnp.ndarray:
    """pe buffer identical to the PyTorch __init__, shape (max_len, d_model)."""
    position = jnp.arange(max_len, dtype=jnp.float32)[:, None]                   # (L, 1)
    div_term = jnp.exp(
        jnp.arange(0, d_model, 2, dtype=jnp.float32) * (-math.log(10000.0) / d_model)
    )                                                                            # (ceil(D/2),)
    angles = position * div_term                                                 # (L, ceil(D/2))
    pe = jnp.zeros((max_len, d_model), dtype=jnp.float32)
    pe = pe.at[:, 0::2].set(jnp.sin(angles))
    pe = pe.at[:, 1::2].set(jnp.cos(angles)[:, : d_model // 2])  # odd d_model safe
    return pe


def _default_seq_tile(S: int, B: int, D: int, itemsize: int,
                      target_block_bytes: int = 4 << 20) -> int:
    """Pick a seq tile so the x block is a few MiB (good HBM roofline, fits VMEM)."""
    row_bytes = max(1, B * D * itemsize)
    tile = max(1, target_block_bytes // row_bytes)
    tile = min(tile, S)
    # Ensure >= 2 grid steps (when possible) so the "parallel" seq axis can
    # actually be split across the two TensorCores on v7x.
    if tile >= S and S > 1:
        tile = pl.cdiv(S, 2)
    return int(tile)


def positional_encoding_forward(x: jnp.ndarray, pe: jnp.ndarray,
                                seq_tile: int | None = None,
                                donate_x: bool = False) -> jnp.ndarray:
    """x: (S, B, D);  pe: (max_len, D).  Returns x + pe[:S][:, None, :]."""
    S, B, D = x.shape
    if pe.shape[0] < S:
        raise ValueError(f"sequence length {S} exceeds pe table max_len {pe.shape[0]}")
    if pe.shape[1] != D:
        raise ValueError(f"d_model mismatch: x has {D}, pe table has {pe.shape[1]}")

    pe_slice = pe[:S].reshape(S, 1, D).astype(x.dtype)  # glue slice in plain JAX

    itemsize = jnp.dtype(x.dtype).itemsize
    if seq_tile is None:
        seq_tile = _default_seq_tile(S, B, D, itemsize)
    seq_tile = max(1, min(int(seq_tile), S))
    grid = (pl.cdiv(S, seq_tile),)          # Pallas masks the ragged last block

    # Double-buffered working set estimate: 2 x (x block + out block + pe block).
    x_block_bytes = seq_tile * B * D * itemsize
    pe_block_bytes = seq_tile * D * itemsize
    working = 2 * (2 * x_block_bytes + pe_block_bytes)
    # 48 MiB ceiling: above every generation's scoped-VMEM default, below v7x's
    # 64 MiB physical VMEM.
    vmem_limit = int(min(max(32 << 20, 2 * working), 48 << 20))

    return pl.pallas_call(
        _pe_add_kernel,
        out_shape=jax.ShapeDtypeStruct((S, B, D), x.dtype),
        grid_spec=pltpu.PrefetchScalarGridSpec(
            num_scalar_prefetch=0,
            grid=grid,
            in_specs=[
                pl.BlockSpec((seq_tile, B, D), lambda i: (i, 0, 0)),
                pl.BlockSpec((seq_tile, 1, D), lambda i: (i, 0, 0)),
            ],
            out_specs=pl.BlockSpec((seq_tile, B, D), lambda i: (i, 0, 0)),
        ),
        compiler_params=pltpu.CompilerParams(
            dimension_semantics=("parallel",),
            vmem_limit_bytes=vmem_limit,
        ),
        input_output_aliases=({0: 0} if donate_x else {}),
    )(x, pe_slice)


if __name__ == "__main__":
    # Small shapes consistent with the module: seq=8, batch=2, d_model=32
    S, B, D = 8, 2, 32
    key = jax.random.PRNGKey(0)
    x = jax.random.normal(key, (S, B, D), dtype=jnp.float32)

    pe = make_positional_encoding_table(d_model=D, max_len=64)

    out = positional_encoding_forward(x, pe)
    out = jax.block_until_ready(out)

    # Reference check (plain JAX, mirrors the torch forward semantics)
    ref = x + pe[:S][:, None, :]
    assert out.shape == (S, B, D)
    assert jnp.allclose(out, ref, atol=1e-6), "mismatch vs reference"

    print("KERNEL_OK")
</pallas_src>

<mosaic_0001>
module attributes {stable_mosaic.version = 11 : i64} {
  func.func @_pe_add_kernel(%arg0: i32, %arg1: memref<4x2x32xf32, #tpu.memory_space<vmem>>, %arg2: memref<4x1x32xf32, #tpu.memory_space<vmem>>, %arg3: memref<4x2x32xf32, #tpu.memory_space<vmem>>) attributes {dimension_semantics = [#tpu.dimension_semantics<parallel>], iteration_bounds = array<i64: 2>, scalar_prefetch = 0 : i64, scratch_operands = 0 : i64, tpu.core_type = #tpu.core_type<tc>, window_params = [{transform_indices = @transform_0, window_bounds = array<i64: 4, 2, 32>}, {transform_indices = @transform_1, window_bounds = array<i64: 4, 1, 32>}, {transform_indices = @transform_2, window_bounds = array<i64: 4, 2, 32>}]} {
    %c0 = arith.constant 0 : index
    %c0_0 = arith.constant 0 : index
    %c0_1 = arith.constant 0 : index
    %0 = vector.load %arg1[%c0, %c0_0, %c0_1] : memref<4x2x32xf32, #tpu.memory_space<vmem>>, vector<4x2x32xf32>
    %c0_2 = arith.constant 0 : index
    %c0_3 = arith.constant 0 : index
    %c0_4 = arith.constant 0 : index
    %1 = vector.load %arg2[%c0_2, %c0_3, %c0_4] : memref<4x1x32xf32, #tpu.memory_space<vmem>>, vector<4x1x32xf32>
    %2 = vector.broadcast %1 : vector<4x1x32xf32> to vector<4x2x32xf32>
    %3 = arith.addf %0, %2 : vector<4x2x32xf32>
    %c0_5 = arith.constant 0 : index
    %c0_6 = arith.constant 0 : index
    %c0_7 = arith.constant 0 : index
    %4 = vector.load %arg3[%c0_5, %c0_6, %c0_7] : memref<4x2x32xf32, #tpu.memory_space<vmem>>, vector<4x2x32xf32>
    tpu.vector_store %arg3[%c0_5, %c0_6, %c0_7], %3 {strides = array<i32>} : memref<4x2x32xf32, #tpu.memory_space<vmem>>, vector<4x2x32xf32>,
    return
  }
  func.func @transform_0(%arg0: i32) -> (i32, i32, i32) {
    %c0_i32 = arith.constant 0 : i32
    %c0_i32_0 = arith.constant 0 : i32
    %c0_i32_1 = arith.constant 0 : i32
    return %arg0, %c0_i32, %c0_i32_0 : i32, i32, i32
  }
  func.func @transform_1(%arg0: i32) -> (i32, i32, i32) {
    %c0_i32 = arith.constant 0 : i32
    %c0_i32_0 = arith.constant 0 : i32
    %c0_i32_1 = arith.constant 0 : i32
    return %arg0, %c0_i32, %c0_i32_0 : i32, i32, i32
  }
  func.func @transform_2(%arg0: i32) -> (i32, i32, i32) {
    %c0_i32 = arith.constant 0 : i32
    %c0_i32_0 = arith.constant 0 : i32
    %c0_i32_1 = arith.constant 0 : i32
    return %arg0, %c0_i32, %c0_i32_0 : i32, i32, i32
  }
}

</mosaic_0001>

<llo_original>
// kernel: tpu_custom_call.1
$region0: #{tpu_custom_call.1}
  #allocation0 [shape = 'u32[]', space=smem, size = 0x4, offset = 0x4, fixed_abs, tag = 'smem constant byte address 0x4 - core index']
  #allocation1 [shape = 'u32[72,128]{1,0:T(1,128)}', space=vmem, size = 0x9000, scoped, tag = 'internal scratch']
  %s0 = inlined_call_operand.hbm [shape: f32[8,2,32], index: 0, kind: input, shape index: {}]
  %s1 = inlined_call_operand.hbm [shape: f32[8,1,32], index: 1, kind: input, shape index: {}]
  %s2 = inlined_call_operand.hbm [shape: f32[8,2,32], index: 2, kind: output, shape index: {}]
  %s3 = sld [smem:[#allocation0]]
  $region49: #{tpu_custom_call.1} parent=0
    _
  %s5 = ssub.s32 1, %s3
  %s6 = scalar_select 0, %s5, %s3
  $region1: #{tpu_custom_call.1} parent=0
    #allocation2 [shape = 'u8[8192]{0}', space=vmem, size = 0x2000, scoped, tag = 'input window, operand 0']
    #allocation3 [shape = 's32[2]{0}', space=sflag, size = 0x8, scoped, tag = 'scoped memory for tpu_custom_call.1']
    #allocation4 [shape = 's32[2]{0}', space=sflag, size = 0x8, scoped, tag = 'scoped memory for tpu_custom_call.1']
    #allocation5 [shape = 'u8[4096]{0}', space=vmem, size = 0x1000, scoped, tag = 'input window, operand 1']
    #allocation6 [shape = 's32[2]{0}', space=sflag, size = 0x8, scoped, tag = 'scoped memory for tpu_custom_call.1']
    #allocation7 [shape = 'u8[8192]{0}', space=vmem, size = 0x2000, scoped, tag = 'output window, operand 0']
    %7 = vsyncpa [#allocation3], 0
    %s8 = scalar_lea.sflag [#allocation3], 1
    %9 = vsyncpa %s8, 0
    %10 = vsyncpa [#allocation6], 0
    %s11 = scalar_lea.sflag [#allocation6], 1
    %12 = vsyncpa %s11, 0
    %13 = vsyncpa [#allocation4], 0
    %s14 = scalar_lea.sflag [#allocation4], 1
    %15 = vsyncpa %s14, 0
    loop: start=0, step=1, limit=4
    $region2: #{tpu_custom_call.1} parent=1 // loop_pre_header
      _
    $region3: #{tpu_custom_call.1} parent=1 // loop_header
      %s17 = sphi 0, %s21
      %p18 = scmp.ge.s32.totalorder %s17, 4
      %s27 = sphi 0, %s29
      %s30 = sphi 0, %s27
      %s31 = sphi 0, %s30
      %s47 = sphi 0, %s31
      %s53 = sphi 0, %s55
      %s56 = sphi 0, %s53
      %s57 = sphi 0, %s56
      %s73 = sphi 0, %s57
      %s79 = sphi 0, %s81
      %s82 = sphi 0, %s79
      %s83 = sphi 0, %s82
      %s99 = sphi 0, %s83
    $region4: #{tpu_custom_call.1} parent=1 // loop_header_branch
      %20 = sbr.rel (%p18) target = $region8
    $region5: #{tpu_custom_call.1} parent=1 // loop_body
      %s22 = ssub.s32 %s17, 1
      %s23 = ssub.s32 %s17, 2
      %s24 = sadd.s32 %s17, 1
      %s25 = ssub.s32 %s17, %s24
      %p26 = scmp.eq.s32.totalorder %s25, 0
      %s28 = sadd.s32 %s27, 1
      %s29 = scalar_select %p26, %s27, %s28
      %p32 = pneg %p26
      %p33 = scmp.eq.s32.totalorder %s17, 1
      %p34 = por %p32, %p33
      %p35 = scmp.ne.s32.totalorder %s27, %s30
      %p36 = scmp.eq.s32.totalorder %s17, 0
      %p37 = por %p35, %p36
      %p38 = scmp.ne.s32.totalorder %s27, %s30
      %p39 = scmp.eq.s32.totalorder %s22, 1
      %p40 = por %p38, %p39
      %p41 = scmp.ne.s32.totalorder %s30, %s31
      %p42 = scmp.eq.s32.totalorder %s22, 0
      %p43 = por %p41, %p42
      %p44 = scmp.ne.s32.totalorder %s30, %s31
      %p45 = scmp.eq.s32.totalorder %s23, 1
      %p46 = por %p44, %p45
      %p48 = scmp.ne.s32.totalorder %s31, %s47
      %p49 = scmp.eq.s32.totalorder %s23, 0
      %p50 = por %p48, %p49
      %s51 = ssub.s32 %s17, %s24
      %p52 = scmp.eq.s32.totalorder %s51, 0
      %s54 = sadd.s32 %s53, 1
      %s55 = scalar_select %p52, %s53, %s54
      %p58 = pneg %p52
      %p59 = scmp.eq.s32.totalorder %s17, 1
      %p60 = por %p58, %p59
      %p61 = scmp.ne.s32.totalorder %s53, %s56
      %p62 = scmp.eq.s32.totalorder %s17, 0
      %p63 = por %p61, %p62
      %p64 = scmp.ne.s32.totalorder %s53, %s56
      %p65 = scmp.eq.s32.totalorder %s22, 1
      %p66 = por %p64, %p65
      %p67 = scmp.ne.s32.totalorder %s56, %s57
      %p68 = scmp.eq.s32.totalorder %s22, 0
      %p69 = por %p67, %p68
      %p70 = scmp.ne.s32.totalorder %s56, %s57
      %p71 = scmp.eq.s32.totalorder %s23, 1
      %p72 = por %p70, %p71
      %p74 = scmp.ne.s32.totalorder %s57, %s73
      %p75 = scmp.eq.s32.totalorder %s23, 0
      %p76 = por %p74, %p75
      %s77 = ssub.s32 %s17, %s24
      %p78 = scmp.eq.s32.totalorder %s77, 0
      %s80 = sadd.s32 %s79, 1
      %s81 = scalar_select %p78, %s79, %s80
      %p84 = pneg %p78
      %p85 = scmp.eq.s32.totalorder %s17, 1
      %p86 = por %p84, %p85
      %p87 = scmp.ne.s32.totalorder %s79, %s82
      %p88 = scmp.eq.s32.totalorder %s17, 0
      %p89 = por %p87, %p88
      %p90 = scmp.ne.s32.totalorder %s79, %s82
      %p91 = scmp.eq.s32.totalorder %s22, 1
      %p92 = por %p90, %p91
      %p93 = scmp.ne.s32.totalorder %s82, %s83
      %p94 = scmp.eq.s32.totalorder %s22, 0
      %p95 = por %p93, %p94
      %p96 = scmp.ne.s32.totalorder %s82, %s83
      %p97 = scmp.eq.s32.totalorder %s23, 1
      %p98 = por %p96, %p97
      %p100 = scmp.ne.s32.totalorder %s83, %s99
      %p101 = scmp.eq.s32.totalorder %s23, 0
      %p102 = por %p100, %p101
      %p103 = scmp.le.s32.totalorder 1, %s17
      %p104 = scmp.lt.s32.totalorder %s17, 3
      %p105 = pnand %p103, %p104
      %p106 = pneg %p105
      // Predicated region
      $region9: #{tpu_custom_call.1} parent=5 // pred_check
        _
      $region10: #{tpu_custom_call.1} parent=5 // pred_check_branch
        %108 = sbr.rel (%p105) target = $region12
      $region11: #{tpu_custom_call.1} parent=5 // pred_region
        %s109 = ssub.s32 %s17, 1
      $region12: #{tpu_custom_call.1} parent=5 // pred_fallthru
        _
      %p110 = scmp.lt.s32.totalorder %s17, 2
      // Predicated region
      $region13: #{tpu_custom_call.1} parent=5 // pred_check
        %p111 = pneg %p110
      $region14: #{tpu_custom_call.1} parent=5 // pred_check_branch
        %113 = sbr.rel (%p111) target = $region16
      $region15: #{tpu_custom_call.1} parent=5 // pred_region
        // Predicated region
        $region17: #{tpu_custom_call.1} parent=15 // pred_check
          %p114 = pneg %p37
        $region18: #{tpu_custom_call.1} parent=15 // pred_check_branch
          %116 = sbr.rel (%p114) target = $region20
        $region19: #{tpu_custom_call.1} parent=15 // pred_region
          %s117 = sand.u32 %s27, 1
          %s118 = scalar_lea.sflag [#allocation3], %s117
          %s119 = sand.u32 %s27, 1
          %s120 = smul.addr %s119, 8
          %s121 = scalar_lea.vmem [#allocation2], %s120
          %s122 = smul.u32 4, %s17
          %124 = vsyncadd %s118, 0
          %s125 = smul.addr %s122, 2
          %s126 = scalar_lea.hbm %s0, %s125
          %s127 = sshll.u32 %s126, 4
          %s128 = int_to_ptr.hbm [resolvable:$true] %s127
          %s129 = sshll.u32 %s121, 4
          %s130 = int_to_ptr.vmem [resolvable:$true] %s129
          %135 = dma.hbm_to_vmem [thread:$0]  %s128, 128, %s130, %s118, 32, 32, 2
        $region20: #{tpu_custom_call.1} parent=15 // pred_fallthru
          _
        // Predicated region
        $region21: #{tpu_custom_call.1} parent=15 // pred_check
          %p136 = pneg %p63
        $region22: #{tpu_custom_call.1} parent=15 // pred_check_branch
          %138 = sbr.rel (%p136) target = $region24
        $region23: #{tpu_custom_call.1} parent=15 // pred_region
          %s139 = sand.u32 %s53, 1
          %s140 = scalar_lea.sflag [#allocation6], %s139
          %s141 = sand.u32 %s53, 1
          %s142 = smul.addr %s141, 4
          %s143 = scalar_lea.vmem [#allocation5], %s142
          %s144 = smul.u32 4, %s17
          %146 = vsyncadd %s140, 0
          %s147 = scalar_lea.hbm %s1, %s144
          %s148 = sshll.u32 %s147, 4
          %s149 = int_to_ptr.hbm [resolvable:$true] %s148
          %s150 = sshll.u32 %s143, 4
          %s151 = int_to_ptr.vmem [resolvable:$true] %s150
          %156 = dma.hbm_to_vmem [thread:$0]  %s149, 64, %s151, %s140, 16, 16, 1
        $region24: #{tpu_custom_call.1} parent=15 // pred_fallthru
          _
      $region16: #{tpu_custom_call.1} parent=5 // pred_fallthru
        _
      %p157 = scmp.le.s32.totalorder 1, %s17
      %p158 = scmp.lt.s32.totalorder %s17, 3
      %p159 = pnand %p157, %p158
      %p160 = pneg %p159
      // Predicated region
      $region25: #{tpu_custom_call.1} parent=5 // pred_check
        _
      $region26: #{tpu_custom_call.1} parent=5 // pred_check_branch
        %162 = sbr.rel (%p159) target = $region28
      $region27: #{tpu_custom_call.1} parent=5 // pred_region
        %s163 = ssub.s32 %s17, 1
        %s164 = sand.u32 %s30, 1
        %s165 = scalar_lea.sflag [#allocation3], %s164
        %s166 = sand.u32 %s30, 1
        %s167 = smul.addr %s166, 8
        %s168 = scalar_lea.vmem [#allocation2], %s167
        // Predicated region
        $region29: #{tpu_custom_call.1} parent=27 // pred_check
          %p169 = pneg %p43
        $region30: #{tpu_custom_call.1} parent=27 // pred_check_branch
          %171 = sbr.rel (%p169) target = $region32
        $region31: #{tpu_custom_call.1} parent=27 // pred_region
          %173 = dma.done %s165, 128
        $region32: #{tpu_custom_call.1} parent=27 // pred_fallthru
          _
        %s174 = sand.u32 %s56, 1
        %s175 = scalar_lea.sflag [#allocation6], %s174
        %s176 = sand.u32 %s56, 1
        %s177 = smul.addr %s176, 4
        %s178 = scalar_lea.vmem [#allocation5], %s177
        // Predicated region
        $region33: #{tpu_custom_call.1} parent=27 // pred_check
          %p179 = pneg %p69
        $region34: #{tpu_custom_call.1} parent=27 // pred_check_branch
          %181 = sbr.rel (%p179) target = $region36
        $region35: #{tpu_custom_call.1} parent=27 // pred_region
          %183 = dma.done %s175, 64
        $region36: #{tpu_custom_call.1} parent=27 // pred_fallthru
          _
        %s184 = sand.u32 %s30, 1
        %s185 = scalar_lea.sflag [#allocation3], %s184
        %s186 = sand.u32 %s30, 1
        %s187 = smul.addr %s186, 8
        %s188 = scalar_lea.vmem [#allocation2], %s187
        %p189 = pneg %p43
        %p190 = pneg %p40
        %s191 = sand.u32 %s56, 1
        %s192 = scalar_lea.sflag [#allocation6], %s191
        %s193 = sand.u32 %s56, 1
        %s194 = smul.addr %s193, 4
        %s195 = scalar_lea.vmem [#allocation5], %s194
        %p196 = pneg %p69
        %p197 = pneg %p66
        %p198 = pneg %p95
        %p199 = pneg %p92
        %s200 = sand.u32 %s82, 1
        %s201 = scalar_lea.sflag [#allocation4], %s200
        %s202 = sand.u32 %s82, 1
        %s203 = smul.addr %s202, 8
        %s204 = scalar_lea.vmem [#allocation7], %s203
        %s205 = smul.u32 4, %s22
        %s206 = smul.u32 4, %s22
        %s207 = smul.u32 4, %s22
        %v208 = vld [vmem:[%s168] sm:$0x3]
        %v209 = vld [vmem:[%s168 + $0x2] sm:$0x3]
        %v210 = vld [vmem:[%s168 + $0x4] sm:$0x3]
        %v211 = vld [vmem:[%s168 + $0x6] sm:$0x3]
        %v212 = vld [vmem:[%s178] sm:$0x1]
        %v213 = vld [vmem:[%s178 + $0x1] sm:$0x1]
        %v214 = vld [vmem:[%s178 + $0x2] sm:$0x1]
        %v215 = vld [vmem:[%s178 + $0x3] sm:$0x1]
        %v220 = vperm.slane %v212, 0
        %v221 = vperm.slane %v213, 0
        %v222 = vperm.slane %v214, 0
        %v223 = vperm.slane %v215, 0
        %v228 = vadd.f32 %v208, %v220
        %v229 = vadd.f32 %v209, %v221
        %v230 = vadd.f32 %v210, %v222
        %v231 = vadd.f32 %v211, %v223
        %vm232 = vcmask 254976
        %233 = vst.msk [vmem:[%s204] sm:$0x3] %vm232, %v228
        %234 = vst.msk [vmem:[%s204 + $0x2] sm:$0x3] %vm232, %v229
        %235 = vst.msk [vmem:[%s204 + $0x4] sm:$0x3] %vm232, %v230
        %236 = vst.msk [vmem:[%s204 + $0x6] sm:$0x3] %vm232, %v231
        %s237 = sand.u32 %s82, 1
        %s238 = scalar_lea.sflag [#allocation4], %s237
        %s239 = sand.u32 %s82, 1
        %s240 = smul.addr %s239, 8
        %s241 = scalar_lea.vmem [#allocation7], %s240
        // Predicated region
        $region37: #{tpu_custom_call.1} parent=27 // pred_check
          %p242 = pneg %p92
        $region38: #{tpu_custom_call.1} parent=27 // pred_check_branch
          %244 = sbr.rel (%p242) target = $region40
        $region39: #{tpu_custom_call.1} parent=27 // pred_region
          %s245 = smul.u32 4, %s22
          %247 = vsyncadd %s238, 0
          %s248 = smul.addr %s245, 2
          %s249 = scalar_lea.hbm %s2, %s248
          %s250 = sshll.u32 %s241, 4
          %s251 = int_to_ptr.vmem [resolvable:$true] %s250
          %s252 = sshll.u32 %s249, 4
          %s253 = int_to_ptr.hbm [resolvable:$true] %s252
          %258 = dma.vmem_to_hbm [thread:$0]  %s251, 128, %s253, %s238, 32, 32, 2
        $region40: #{tpu_custom_call.1} parent=27 // pred_fallthru
          _
      $region28: #{tpu_custom_call.1} parent=5 // pred_fallthru
        _
      %p259 = scmp.le.s32.totalorder 2, %s17
      // Predicated region
      $region41: #{tpu_custom_call.1} parent=5 // pred_check
        %p260 = pneg %p259
      $region42: #{tpu_custom_call.1} parent=5 // pred_check_branch
        %262 = sbr.rel (%p260) target = $region44
      $region43: #{tpu_custom_call.1} parent=5 // pred_region
        %s263 = ssub.s32 %s17, 2
        // Predicated region
        $region45: #{tpu_custom_call.1} parent=43 // pred_check
          %p264 = pneg %p98
        $region46: #{tpu_custom_call.1} parent=43 // pred_check_branch
          %266 = sbr.rel (%p264) target = $region48
        $region47: #{tpu_custom_call.1} parent=43 // pred_region
          %s267 = sand.u32 %s83, 1
          %s268 = scalar_lea.sflag [#allocation4], %s267
          %s269 = sand.u32 %s83, 1
          %s270 = smul.addr %s269, 8
          %s271 = scalar_lea.vmem [#allocation7], %s270
          %273 = dma.done %s268, 128
        $region48: #{tpu_custom_call.1} parent=43 // pred_fallthru
          _
      $region44: #{tpu_custom_call.1} parent=5 // pred_fallthru
        _
    $region6: #{tpu_custom_call.1} parent=1 // loop_footer
      %s21 = sadd.s32 1, %s17
    $region7: #{tpu_custom_call.1} parent=1 // loop_footer_branch
      %16 = sbr.rel target = $region3
    $region8: #{tpu_custom_call.1} parent=1 // loop_exit
      _
    %274 = vsyncpa [#allocation3], 1
    %s275 = scalar_lea.sflag [#allocation3], 1
    %276 = vsyncpa %s275, 1
    %277 = vsyncpa [#allocation6], 1
    %s278 = scalar_lea.sflag [#allocation6], 1
    %279 = vsyncpa %s278, 1
    %280 = vsyncpa [#allocation4], 1
    %s281 = scalar_lea.sflag [#allocation4], 1
    %282 = vsyncpa %s281, 1

</llo_original>
